<compile_context>
chip_gen: v6e
topology: v6e:2x2x1
jax: 0.10.0
libtpu: 0.0.40
codegen_flags: <defaults>
</compile_context>

<pallas_src>
import functools
import math

import jax
import jax.numpy as jnp
from jax import lax
from jax.experimental import pallas as pl
from jax.experimental.pallas import tpu as pltpu

NEG_LOGIT = -100000.0


def _round_up(x, m):
    return (x + m - 1) // m * m


# ----------------------------------------------------------------------------
# Tiled matmul + bias (hoisted LSTM input projection).
# ----------------------------------------------------------------------------
def _matmul_bias_kernel(x_ref, w_ref, b_ref, o_ref):
    o_ref[...] = (jnp.dot(x_ref[...], w_ref[...],
                          preferred_element_type=jnp.float32) + b_ref[...])


def linear(x, w, b, tm=512):
    """x: [M, K] @ w: [K, N] + b: [1, N] with M tiled over a 1-D grid."""
    M, K = x.shape
    N = w.shape[1]
    TM = min(tm, _round_up(M, 8))
    Mp = _round_up(M, TM)
    if Mp != M:
        x = jnp.pad(x, ((0, Mp - M), (0, 0)))
    out = pl.pallas_call(
        _matmul_bias_kernel,
        out_shape=jax.ShapeDtypeStruct((Mp, N), jnp.float32),
        grid_spec=pltpu.PrefetchScalarGridSpec(
            num_scalar_prefetch=0,
            grid=(Mp // TM,),
            in_specs=[pl.BlockSpec((TM, K), lambda i: (i, 0)),
                      pl.BlockSpec((K, N), lambda i: (0, 0)),
                      pl.BlockSpec((1, N), lambda i: (0, 0))],
            out_specs=pl.BlockSpec((TM, N), lambda i: (i, 0)),
        ),
        compiler_params=pltpu.CompilerParams(dimension_semantics=("parallel",)),
    )(x, w, b)
    return out[:M]


# ----------------------------------------------------------------------------
# Fused bidirectional masked LSTM recurrence (packed-sequence equivalent) with
# fused max-over-time pooling.  grid=(2,): program 0 = fwd, program 1 = bwd.
# ----------------------------------------------------------------------------
def _bilstm_rec_kernel(gx_ref, m_ref, whh_ref, out_ref, hmax_ref, h_scr, c_scr):
    d = pl.program_id(0)                       # 0 = forward, 1 = backward
    T = m_ref.shape[0]
    Hh = h_scr.shape[-1]

    whh = whh_ref[...]                         # [Hh, 4*Hh] -- loop-invariant, hoisted
    h_scr[...] = jnp.zeros_like(h_scr)
    c_scr[...] = jnp.zeros_like(c_scr)

    def step(k, carry):
        t = jnp.where(d == 0, k, T - 1 - k)
        m = m_ref[t]                           # [Bp, 1]  (1.0 valid token, 0.0 pad)
        h = h_scr[...]
        c = c_scr[...]
        # one fused recurrent matmul for all 4 gates + precomputed x-gates
        z = gx_ref[t] + jnp.dot(h, whh, preferred_element_type=jnp.float32)  # [Bp, 4*Hh]
        i_g = jax.nn.sigmoid(z[:, 0 * Hh:1 * Hh])
        f_g = jax.nn.sigmoid(z[:, 1 * Hh:2 * Hh])
        g_g = jnp.tanh(z[:, 2 * Hh:3 * Hh])
        o_g = jax.nn.sigmoid(z[:, 3 * Hh:4 * Hh])
        c_new = f_g * c + i_g * g_g
        h_new = o_g * jnp.tanh(c_new)
        # packed-sequence semantics: pads do not update state and emit 0 output
        h_scr[...] = m * h_new + (1.0 - m) * h
        c_scr[...] = m * c_new + (1.0 - m) * c
        out_ref[t] = m * h_new
        return carry

    lax.fori_loop(0, T, step, 0)
    # fused max-over-time pooling (pads contribute exactly 0, matching torch)
    hmax_ref[...] = jnp.max(out_ref[...], axis=0)


def bilstm(x, mask_f, layer):
    """x: [T, Bp, Hin], mask_f: [T, Bp, 1] -> (seq [T, Bp, 2*Hh], rep [Bp, 2*Hh])."""
    T, Bp, Hin = x.shape
    Hh = layer["whh_all"].shape[1]

    # hoisted input projection: one big lane-dense MXU matmul for both directions
    gates = linear(x.reshape(T * Bp, Hin), layer["wih_all"], layer["b_all"])   # [T*Bp, 8*Hh]
    # re-layout ONCE: per-step access becomes a single leading-axis index
    gates = gates.reshape(T, Bp, 2, 4 * Hh).transpose(2, 0, 1, 3)              # [2, T, Bp, 4*Hh]

    out, hmax = pl.pallas_call(
        _bilstm_rec_kernel,
        out_shape=(jax.ShapeDtypeStruct((2, T, Bp, Hh), jnp.float32),
                   jax.ShapeDtypeStruct((2, Bp, Hh), jnp.float32)),
        grid_spec=pltpu.PrefetchScalarGridSpec(
            num_scalar_prefetch=0,
            grid=(2,),                                   # fwd/bwd on the grid
            in_specs=[pl.BlockSpec((None, T, Bp, 4 * Hh), lambda d: (d, 0, 0, 0)),
                      pl.BlockSpec((T, Bp, 1), lambda d: (0, 0, 0)),
                      pl.BlockSpec((None, Hh, 4 * Hh), lambda d: (d, 0, 0))],
            out_specs=[pl.BlockSpec((None, T, Bp, Hh), lambda d: (d, 0, 0, 0)),
                       pl.BlockSpec((None, Bp, Hh), lambda d: (d, 0, 0))],
            scratch_shapes=[pltpu.VMEM((Bp, Hh), jnp.float32),
                            pltpu.VMEM((Bp, Hh), jnp.float32)],
        ),
        compiler_params=pltpu.CompilerParams(dimension_semantics=("parallel",)),
    )(gates, mask_f, layer["whh_all"])

    seq = jnp.concatenate([out[0], out[1]], axis=-1)     # [T, Bp, 2*Hh]
    rep = jnp.concatenate([hmax[0], hmax[1]], axis=-1)   # [Bp, 2*Hh]
    return seq, rep


# ----------------------------------------------------------------------------
# Fused CRF kernel: hidden2tag emissions (one MXU matmul, VMEM-resident),
# log-partition DP, Viterbi DP and in-kernel backtrace, all in one pass over h.
# ----------------------------------------------------------------------------
def _crf_kernel(h_ref, w_ref, b_ref, trans_ref, logz_ref, tags_ref, score_ref,
                emit_scr, bp_scr, *, start_tag, end_tag, do_partition, do_viterbi):
    T, Bp, H = h_ref.shape
    TAGP = trans_ref.shape[0]

    # emissions for ALL time steps in one big MXU matmul (never leave VMEM)
    emit_scr[...] = (jnp.dot(h_ref[...].reshape(T * Bp, H), w_ref[...],
                             preferred_element_type=jnp.float32)
                     + b_ref[...]).reshape(T, Bp, TAGP)

    trans = trans_ref[...]
    trans_b = jnp.broadcast_to(trans[None, :, :], (Bp, TAGP, TAGP))   # hoisted broadcast
    end_row = trans[end_tag, :][None, :]                              # [1, TAGP]
    col = lax.broadcasted_iota(jnp.int32, (Bp, TAGP), 1)
    init_dp = jnp.where(col == start_tag, 0.0, NEG_LOGIT)

    if do_partition:
        def fwd_lse(t, dp):
            cur = trans_b + emit_scr[t][:, :, None] + dp[:, None, :]   # [Bp, cur, prev]
            m = jnp.max(cur, axis=-1)
            return m + jnp.log(jnp.sum(jnp.exp(cur - m[..., None]), axis=-1))

        dp = lax.fori_loop(0, T, fwd_lse, init_dp)
        final = dp + end_row
        mm = jnp.max(final, axis=-1, keepdims=True)
        logz_ref[...] = mm + jnp.log(jnp.sum(jnp.exp(final - mm), axis=-1, keepdims=True))
    else:
        logz_ref[...] = jnp.zeros_like(logz_ref)

    if do_viterbi:
        def fwd_max(t, dp):
            score = trans_b + emit_scr[t][:, :, None] + dp[:, None, :]
            bp_scr[t] = jnp.argmax(score, axis=-1).astype(jnp.int32)
            return jnp.max(score, axis=-1)

        dp = lax.fori_loop(0, T, fwd_max, init_dp)
        final = dp + end_row
        score_ref[...] = jnp.max(final, axis=-1, keepdims=True)
        best0 = jnp.argmax(final, axis=-1)[:, None].astype(jnp.int32)  # [Bp, 1]

        # in-kernel backtrace: backpointers never leave VMEM
        def bwd(k, best):
            t = T - 1 - k
            tags_ref[t] = best
            bp_t = bp_scr[t]                                           # [Bp, TAGP]
            return jnp.sum(jnp.where(col == best, bp_t, 0),
                           axis=-1, keepdims=True)                     # bp_t[b, best[b]]

        lax.fori_loop(0, T, bwd, best0)
    else:
        tags_ref[...] = jnp.zeros_like(tags_ref)
        score_ref[...] = jnp.zeros_like(score_ref)


def crf_forward(h, w_p, b_p, trans_p, start_tag, end_tag, do_partition, do_viterbi):
    T, Bp, H = h.shape
    TAGP = trans_p.shape[0]
    kernel = functools.partial(_crf_kernel, start_tag=start_tag, end_tag=end_tag,
                               do_partition=do_partition, do_viterbi=do_viterbi)
    logz, tags, score = pl.pallas_call(
        kernel,
        out_shape=(jax.ShapeDtypeStruct((Bp, 1), jnp.float32),
                   jax.ShapeDtypeStruct((T, Bp, 1), jnp.int32),
                   jax.ShapeDtypeStruct((Bp, 1), jnp.float32)),
        scratch_shapes=[pltpu.VMEM((T, Bp, TAGP), jnp.float32),
                        pltpu.VMEM((T, Bp, TAGP), jnp.int32)],
    )(h, w_p, b_p, trans_p)
    return logz, tags[:, :, 0], score                                  # [Bp,1], [T,Bp], [Bp,1]


# ----------------------------------------------------------------------------
# Parameter initialization (deterministic, synthetic, kernel-friendly layouts).
# ----------------------------------------------------------------------------
def _init_bilstm_layer(key, in_size, hh):
    k1, k2, k3 = jax.random.split(key, 3)
    # wih columns ordered (direction, gate, hidden) to match the hoisted projection
    wih_all = jax.random.normal(k1, (in_size, 8 * hh), jnp.float32) * 0.1
    # recurrent weights pre-concatenated per direction: [2, Hh, 4*Hh]
    whh_all = jax.random.normal(k2, (2, hh, 4 * hh), jnp.float32) * 0.1
    b_all = jax.random.normal(k3, (1, 8 * hh), jnp.float32) * 0.1    # b_ih + b_hh pre-summed
    return {"wih_all": wih_all, "whh_all": whh_all, "b_all": b_all}


def init_params(key, cfg):
    H = cfg["hidden_size"]
    Hh = H // 2
    V = cfg["vocab_size"]
    TAG = cfg["num_entity_labels"] + 2
    TAGP = _round_up(TAG, 8)
    start_tag, end_tag = TAG - 2, TAG - 1

    keys = jax.random.split(key, 16)
    params = {}
    params["emb"] = jax.random.normal(keys[0], (V, H), jnp.float32) * 0.1
    params["token_encoder"] = [_init_bilstm_layer(keys[1 + l], H, Hh)
                               for l in range(cfg["num_lstm_layers"])]
    params["sent_encoder"] = _init_bilstm_layer(keys[10], H, Hh)

    h2t_w = jax.random.normal(keys[11], (H, TAG), jnp.float32) * 0.1
    h2t_b = jax.random.normal(keys[12], (1, TAG), jnp.float32) * 0.1
    bound = 1.0 / math.sqrt(TAG)     # kaiming_uniform(a=sqrt(5)) bound on square matrix
    trans = jax.random.uniform(keys[13], (TAG, TAG), jnp.float32, -bound, bound)
    trans = trans.at[start_tag, :].set(NEG_LOGIT)
    trans = trans.at[:, end_tag].set(NEG_LOGIT)
    params["h2t_w"] = h2t_w
    params["h2t_b"] = h2t_b
    params["trans"] = trans

    # tag-padded CRF parameters: padded tags can never win nor contribute to logsumexp
    params["h2t_w_p"] = jnp.zeros((H, TAGP), jnp.float32).at[:, :TAG].set(h2t_w)
    params["h2t_b_p"] = jnp.full((1, TAGP), NEG_LOGIT, jnp.float32).at[:, :TAG].set(h2t_b)
    params["trans_p"] = jnp.full((TAGP, TAGP), NEG_LOGIT, jnp.float32).at[:TAG, :TAG].set(trans)
    return params


# ----------------------------------------------------------------------------
# Full forward pass.
# ----------------------------------------------------------------------------
def stack_lstm_ner_forward(params, cfg, input_ids, input_masks, label_ids=None,
                           train_flag=True, decode_flag=True):
    B, T = input_ids.shape
    TAG = cfg["num_entity_labels"] + 2
    start_tag, end_tag = TAG - 2, TAG - 1

    # pad batch to a sublane multiple; padded rows behave as all-pad sequences
    Bp = _round_up(B, 8)
    ids_p = jnp.pad(input_ids, ((0, Bp - B), (0, 0)))
    masks_p = jnp.pad(input_masks, ((0, Bp - B), (0, 0)))
    mask_f = (masks_p == 1).astype(jnp.float32).T[:, :, None]        # [T, Bp, 1]

    # token embedding (gather, plain XLA) + dropout (identity, eval semantics)
    emb = params["emb"][ids_p]                                       # [Bp, T, H]
    x = jnp.transpose(emb, (1, 0, 2)).astype(jnp.float32)            # [T, Bp, H]

    # stacked bidirectional token encoder (inter-layer dropout -> identity)
    for layer in params["token_encoder"]:
        x, _ = bilstm(x, mask_f, layer)
    ner_output = x                                                   # [T, Bp, H]

    # sentence encoder + fused max-over-time (padded positions contribute 0, as in torch)
    _, sent_reps_p = bilstm(ner_output, mask_f, params["sent_encoder"])
    sent_reps = sent_reps_p[:B]                                      # [B, H]

    trans = params["trans"]
    logz = tags_tb = None
    if train_flag or decode_flag:
        logz, tags_tb, _best_score = crf_forward(
            ner_output, params["h2t_w_p"], params["h2t_b_p"], params["trans_p"],
            start_tag, end_tag, do_partition=train_flag, do_viterbi=decode_flag)

    ner_loss = None
    if train_flag:
        log_partition = logz[:B, 0]
        labels_tb = label_ids.T                                      # [T, B]
        cur = jnp.concatenate(
            [labels_tb, jnp.full((1, B), end_tag, labels_tb.dtype)], axis=0)
        prev = jnp.concatenate(
            [jnp.full((1, B), start_tag, labels_tb.dtype), labels_tb], axis=0)
        trans_score = trans[cur, prev].sum(axis=0)                   # [B]
        # gold emissions without materializing the full [T,B,TAG] emit tensor
        w_rows = params["h2t_w"].T[labels_tb]                        # [T, B, H]
        emit_gold = (jnp.sum(ner_output[:, :B, :] * w_rows, axis=-1)
                     + params["h2t_b"][0][labels_tb])                # [T, B]
        gold_score = trans_score + emit_gold.sum(axis=0)
        ner_loss = log_partition - gold_score

    batch_seq_preds = None
    if decode_flag:
        batch_seq_preds = tags_tb.T[:B]                              # [B, T]

    batch_seq_enc = jnp.transpose(ner_output[:, :B], (1, 0, 2))      # [B, T, H]
    return batch_seq_enc, ner_loss, batch_seq_preds, sent_reps


# ----------------------------------------------------------------------------
if __name__ == "__main__":
    cfg = dict(vocab_size=50, hidden_size=32, num_lstm_layers=2, dropout=0.1,
               num_entity_labels=5, max_sent_len=256, use_crf_layer=True)
    B, T = 2, 8

    key = jax.random.PRNGKey(0)
    pkey, ikey, lkey = jax.random.split(key, 3)
    params = init_params(pkey, cfg)

    input_ids = jax.random.randint(ikey, (B, T), 0, cfg["vocab_size"], dtype=jnp.int32)
    lens = jnp.array([T, T - 3], dtype=jnp.int32)
    input_masks = (jnp.arange(T)[None, :] < lens[:, None]).astype(jnp.int32)
    label_ids = jax.random.randint(lkey, (B, T), 0, cfg["num_entity_labels"],
                                   dtype=jnp.int32)

    outs = stack_lstm_ner_forward(params, cfg, input_ids, input_masks, label_ids,
                                  train_flag=True, decode_flag=True)
    jax.block_until_ready(outs)
    print("KERNEL_OK")
</pallas_src>

<mosaic_0001>
module attributes {stable_mosaic.version = 11 : i64} {
  func.func @_matmul_bias_kernel(%arg0: i32, %arg1: memref<64x32xf32, #tpu.memory_space<vmem>>, %arg2: memref<32x128xf32, #tpu.memory_space<vmem>>, %arg3: memref<1x128xf32, #tpu.memory_space<vmem>>, %arg4: memref<64x128xf32, #tpu.memory_space<vmem>>) attributes {dimension_semantics = [#tpu.dimension_semantics<parallel>], iteration_bounds = array<i64: 1>, scalar_prefetch = 0 : i64, scratch_operands = 0 : i64, tpu.core_type = #tpu.core_type<tc>, window_params = [{transform_indices = @transform_0, window_bounds = array<i64: 64, 32>}, {pipeline_mode = #tpu.pipeline_mode<synchronous>, transform_indices = @transform_1, window_bounds = array<i64: 32, 128>}, {pipeline_mode = #tpu.pipeline_mode<synchronous>, transform_indices = @transform_2, window_bounds = array<i64: 1, 128>}, {transform_indices = @transform_3, window_bounds = array<i64: 64, 128>}]} {
    %c0 = arith.constant 0 : index
    %c0_0 = arith.constant 0 : index
    %0 = vector.load %arg1[%c0, %c0_0] : memref<64x32xf32, #tpu.memory_space<vmem>>, vector<64x32xf32>
    %c0_1 = arith.constant 0 : index
    %c0_2 = arith.constant 0 : index
    %1 = vector.load %arg2[%c0_1, %c0_2] : memref<32x128xf32, #tpu.memory_space<vmem>>, vector<32x128xf32>
    %cst = arith.constant dense<0.000000e+00> : vector<64x128xf32>
    %2 = tpu.matmul %0, %1, %cst {dimension_numbers = #tpu.dot_dimension_numbers<[1], [0], [0], [1], [0, 0, 1, 1], [], []>} : vector<64x32xf32>, vector<32x128xf32>, vector<64x128xf32> -> vector<64x128xf32>
    %c0_3 = arith.constant 0 : index
    %c0_4 = arith.constant 0 : index
    %3 = vector.load %arg3[%c0_3, %c0_4] : memref<1x128xf32, #tpu.memory_space<vmem>>, vector<1x128xf32>
    %4 = vector.broadcast %3 : vector<1x128xf32> to vector<64x128xf32>
    %5 = arith.addf %2, %4 : vector<64x128xf32>
    %c0_5 = arith.constant 0 : index
    %c0_6 = arith.constant 0 : index
    %6 = vector.load %arg4[%c0_5, %c0_6] : memref<64x128xf32, #tpu.memory_space<vmem>>, vector<64x128xf32>
    tpu.vector_store %arg4[%c0_5, %c0_6], %5 {strides = array<i32>} : memref<64x128xf32, #tpu.memory_space<vmem>>, vector<64x128xf32>,
    return
  }
  func.func @transform_0(%arg0: i32) -> (i32, i32) {
    %c0_i32 = arith.constant 0 : i32
    %c0_i32_0 = arith.constant 0 : i32
    return %arg0, %c0_i32 : i32, i32
  }
  func.func @transform_1(%arg0: i32) -> (i32, i32) {
    %c0_i32 = arith.constant 0 : i32
    %c0_i32_0 = arith.constant 0 : i32
    %c0_i32_1 = arith.constant 0 : i32
    return %c0_i32, %c0_i32_0 : i32, i32
  }
  func.func @transform_2(%arg0: i32) -> (i32, i32) {
    %c0_i32 = arith.constant 0 : i32
    %c0_i32_0 = arith.constant 0 : i32
    %c0_i32_1 = arith.constant 0 : i32
    return %c0_i32, %c0_i32_0 : i32, i32
  }
  func.func @transform_3(%arg0: i32) -> (i32, i32) {
    %c0_i32 = arith.constant 0 : i32
    %c0_i32_0 = arith.constant 0 : i32
    return %arg0, %c0_i32 : i32, i32
  }
}

</mosaic_0001>

<llo_original>
// kernel: tpu_custom_call.1
$region0: #{tpu_custom_call.1}
  #allocation0 [shape = 'u32[]', space=smem, size = 0x4, offset = 0x4, fixed_abs, tag = 'smem constant byte address 0x4 - core index']
  #allocation1 [shape = 'u32[144,128]{1,0:T(1,128)}', space=vmem, size = 0x12000, scoped, tag = 'internal scratch']
  %s0 = inlined_call_operand.vmem [shape: f32[64,32], index: 0, kind: input, shape index: {}]
  %s1 = inlined_call_operand.vmem [shape: f32[32,128], index: 1, kind: input, shape index: {}]
  %s2 = inlined_call_operand.vmem [shape: f32[1,128], index: 2, kind: input, shape index: {}]
  %s3 = inlined_call_operand.hbm [shape: f32[64,128], index: 3, kind: output, shape index: {}]
  %s4 = sld [smem:[#allocation0]]
  $region22: #{tpu_custom_call.1} parent=0
    _
  %s6 = ssub.s32 1, %s4
  %s7 = scalar_select 0, %s6, %s4
  $region1: #{tpu_custom_call.1} parent=0
    #allocation2 [shape = 'u8[32768]{0}', space=vmem, size = 0x8000, scoped, tag = 'output window, operand 0, single buffered']
    #allocation3 [shape = 's32[1]{0}', space=sflag, size = 0x4, scoped, tag = 'scoped memory for tpu_custom_call.1']
    %8 = vsyncpa [#allocation3], 0
    // Predicated region
    $region2: #{tpu_custom_call.1} parent=1 // pred_check
      _
    $region3: #{tpu_custom_call.1} parent=1 // pred_check_branch
      %10 = sbr.rel (0) target = $region5
    $region4: #{tpu_custom_call.1} parent=1 // pred_region
      _
    $region5: #{tpu_custom_call.1} parent=1 // pred_fallthru
      _
    // Predicated region
    $region6: #{tpu_custom_call.1} parent=1 // pred_check
      _
    $region7: #{tpu_custom_call.1} parent=1 // pred_check_branch
      %12 = sbr.rel (0) target = $region9
    $region8: #{tpu_custom_call.1} parent=1 // pred_region
      _
    $region9: #{tpu_custom_call.1} parent=1 // pred_fallthru
      _
    // Predicated region
    $region10: #{tpu_custom_call.1} parent=1 // pred_check
      _
    $region11: #{tpu_custom_call.1} parent=1 // pred_check_branch
      %14 = sbr.rel (0) target = $region13
    $region12: #{tpu_custom_call.1} parent=1 // pred_region
      _
    $region13: #{tpu_custom_call.1} parent=1 // pred_fallthru
      _
    %v15 = vld [vmem:[%s0] sm:$0xff]
    %v16 = vld [vmem:[%s0 + $0x8] sm:$0xff]
    %v17 = vld [vmem:[%s0 + $0x10] sm:$0xff]
    %v18 = vld [vmem:[%s0 + $0x18] sm:$0xff]
    %v19 = vld [vmem:[%s0 + $0x20] sm:$0xff]
    %v20 = vld [vmem:[%s0 + $0x28] sm:$0xff]
    %v21 = vld [vmem:[%s0 + $0x30] sm:$0xff]
    %v22 = vld [vmem:[%s0 + $0x38] sm:$0xff]
    %v23 = vld [vmem:[%s1] sm:$0xff]
    %v24 = vld [vmem:[%s1 + $0x8] sm:$0xff]
    %v25 = vld [vmem:[%s1 + $0x10] sm:$0xff]
    %v26 = vld [vmem:[%s1 + $0x18] sm:$0xff]
    %v27 = vld [vmem:[%s2] sm:$0x1]
    %v29 = vlaneseq
    %v30 = vshrl.u32 %v29, 7
    %v31 = vsub.s32 0, %v30
    %v32 = vrot.slane %v27, %v31
    %vm34 = vcmask 261120
    %v36 = vsel %vm34, %v15, 0
    %v39 = vsel %vm34, %v16, 0
    %v42 = vsel %vm34, %v17, 0
    %v45 = vsel %vm34, %v18, 0
    %v48 = vsel %vm34, %v19, 0
    %v51 = vsel %vm34, %v20, 0
    %v54 = vsel %vm34, %v21, 0
    %v57 = vsel %vm34, %v22, 0
    %59 = vmatprep.subr.mxu0 0.0
    %60 = vmatpush1.msra.mxu0 0.0
    %61 = vmatprep.subr.mxu0 0.0
    %62 = vmatpush1.msra.mxu0 0.0
    %63 = vmatprep.subr.mxu0 0.0
    %64 = vmatpush1.msra.mxu0 0.0
    %65 = vmatprep.subr.mxu0 0.0
    %66 = vmatpush1.msra.mxu0 0.0
    %67 = vmatprep.subr.mxu0 0.0
    %68 = vmatpush1.msra.mxu0 0.0
    %69 = vmatprep.subr.mxu0 0.0
    %70 = vmatpush1.msra.mxu0 0.0
    %71 = vmatprep.subr.mxu0 0.0
    %72 = vmatpush1.msra.mxu0 0.0
    %73 = vmatprep.subr.mxu0 0.0
    %74 = vmatpush1.msra.mxu0 0.0
    %75 = vmatprep.subr.mxu0 0.0
    %76 = vmatpush1.msra.mxu0 0.0
    %77 = vmatprep.subr.mxu0 0.0
    %78 = vmatpush1.msra.mxu0 0.0
    %79 = vmatprep.subr.mxu0 0.0
    %80 = vmatpush1.msra.mxu0 0.0
    %81 = vmatprep.subr.mxu0 0.0
    %82 = vmatpush1.msra.mxu0 0.0
    %83 = vmatprep.subr.mxu0 0.0
    %84 = vmatpush1.msra.mxu0 %v26
    %85 = vmatprep.subr.mxu0 0.0
    %86 = vmatpush1.msra.mxu0 %v25
    %87 = vmatprep.subr.mxu0 0.0
    %88 = vmatpush1.msra.mxu0 %v24
    %89 = vmatprep.subr.mxu0 0.0
    %90 = vmatpush1.msra.mxu0 %v23
    %91 = vmatprep.subr.mxu0 0.0
    %92 = vmatpush2.msra.mxu0 0.0
    %93 = vmatprep.subr.mxu0 0.0
    %94 = vmatpush2.msra.mxu0 0.0
    %95 = vmatprep.subr.mxu0 0.0
    %96 = vmatpush2.msra.mxu0 0.0
    %97 = vmatprep.subr.mxu0 0.0
    %98 = vmatpush2.msra.mxu0 0.0
    %99 = vmatprep.subr.mxu0 0.0
    %100 = vmatpush2.msra.mxu0 0.0
    %101 = vmatprep.subr.mxu0 0.0
    %102 = vmatpush2.msra.mxu0 0.0
    %103 = vmatprep.subr.mxu0 0.0
    %104 = vmatpush2.msra.mxu0 0.0
    %105 = vmatprep.subr.mxu0 0.0
    %106 = vmatpush2.msra.mxu0 0.0
    %107 = vmatprep.subr.mxu0 0.0
    %108 = vmatpush2.msra.mxu0 0.0
    %109 = vmatprep.subr.mxu0 0.0
    %110 = vmatpush2.msra.mxu0 0.0
    %111 = vmatprep.subr.mxu0 0.0
    %112 = vmatpush2.msra.mxu0 0.0
    %113 = vmatprep.subr.mxu0 0.0
    %114 = vmatpush2.msra.mxu0 0.0
    %115 = vmatprep.subr.mxu0 0.0
    %116 = vmatpush2.msra.mxu0 0.0
    %117 = vmatprep.subr.mxu0 0.0
    %118 = vmatpush2.msra.mxu0 0.0
    %119 = vmatprep.subr.mxu0 0.0
    %120 = vmatpush2.msra.mxu0 0.0
    %121 = vmatprep.subr.mxu0 0.0
    %122 = vmatpush2.msra.mxu0 0.0
    %123 = vmatprep.mubr.f32.mxu0 0.0
    %124 = vmatmul.mubr.f32.gmra.mxu0 %v36
    %v125 = vpop.f32.mrf.mxu0
    %v126 = vadd.f32 %v32, %v125
    %v127 = vpop.f32.mrf.mxu0
    %128 = vmatprep.mubr.f32.mxu0 0.0
    %129 = vmatmul.mubr.f32.gmra.mxu0 %v39
    %v130 = vpop.f32.mrf.mxu0
    %v131 = vadd.f32 %v32, %v130
    %v132 = vpop.f32.mrf.mxu0
    %133 = vmatprep.mubr.f32.mxu0 0.0
    %134 = vmatmul.mubr.f32.gmra.mxu0 %v42
    %v135 = vpop.f32.mrf.mxu0
    %v136 = vadd.f32 %v32, %v135
    %v137 = vpop.f32.mrf.mxu0
    %138 = vmatprep.mubr.f32.mxu0 0.0
    %139 = vmatmul.mubr.f32.gmra.mxu0 %v45
    %v140 = vpop.f32.mrf.mxu0
    %v141 = vadd.f32 %v32, %v140
    %v142 = vpop.f32.mrf.mxu0
    %143 = vmatprep.mubr.f32.mxu0 0.0
    %144 = vmatmul.mubr.f32.gmra.mxu0 %v48
    %v145 = vpop.f32.mrf.mxu0
    %v146 = vadd.f32 %v32, %v145
    %v147 = vpop.f32.mrf.mxu0
    %148 = vmatprep.mubr.f32.mxu0 0.0
    %149 = vmatmul.mubr.f32.gmra.mxu0 %v51
    %v150 = vpop.f32.mrf.mxu0
    %v151 = vadd.f32 %v32, %v150
    %v152 = vpop.f32.mrf.mxu0
    %153 = vmatprep.mubr.f32.mxu0 0.0
    %154 = vmatmul.mubr.f32.gmra.mxu0 %v54
    %v155 = vpop.f32.mrf.mxu0
    %v156 = vadd.f32 %v32, %v155
    %v157 = vpop.f32.mrf.mxu0
    %158 = vmatprep.mubr.f32.mxu0 0.0
    %159 = vmatmul.mubr.f32.gmra.mxu0 %v57
    %v160 = vpop.f32.mrf.mxu0
    %v161 = vadd.f32 %v32, %v160
    %v162 = vpop.f32.mrf.mxu0
    %163 = vdwg.mxu0
    %164 = vst [vmem:[#allocation2] sm:$0xff] %v126
    %165 = vst [vmem:[#allocation2 + $0x8] sm:$0xff] %v131
    %166 = vst [vmem:[#allocation2 + $0x10] sm:$0xff] %v136
    %167 = vst [vmem:[#allocation2 + $0x18] sm:$0xff] %v141
    %168 = vst [vmem:[#allocation2 + $0x20] sm:$0xff] %v146
    %169 = vst [vmem:[#allocation2 + $0x28] sm:$0xff] %v151
    %170 = vst [vmem:[#allocation2 + $0x30] sm:$0xff] %v156
    %171 = vst [vmem:[#allocation2 + $0x38] sm:$0xff] %v161
    // Predicated region
    $region14: #{tpu_custom_call.1} parent=1 // pred_check
      _
    $region15: #{tpu_custom_call.1} parent=1 // pred_check_branch
      %173 = sbr.rel (0) target = $region17
    $region16: #{tpu_custom_call.1} parent=1 // pred_region
      %s175 = ssub.s32 1024, 1024
      %176 = vsyncadd [#allocation3], %s175
      %s177 = sshll.u32 [#allocation2], 4
      %s178 = int_to_ptr.vmem [resolvable:$true] %s177
      %183 = dma.vmem_to_hbm [thread:$0]  %s178, 1024, %s3, [#allocation3], 128, 128, 8
    $region17: #{tpu_custom_call.1} parent=1 // pred_fallthru
      _
    // Predicated region
    $region18: #{tpu_custom_call.1} parent=1 // pred_check
      _
    $region19: #{tpu_custom_call.1} parent=1 // pred_check_branch
      %185 = sbr.rel (0) target = $region21
    $region20: #{tpu_custom_call.1} parent=1 // pred_region
      %186 = dma.done [#allocation3], 1024
    $region21: #{tpu_custom_call.1} parent=1 // pred_fallthru
      _
    %187 = vsyncpa [#allocation3], 1

</llo_original>
